<compile_context>
chip_gen: v6e
topology: v6e:2x2x1
jax: 0.10.0
libtpu: 0.0.40
codegen_flags: <defaults>
</compile_context>

<pallas_src>
import functools

import jax
import jax.numpy as jnp
from jax import lax
from jax.experimental import pallas as pl
from jax.experimental.pallas import tpu as pltpu


_NEG_SLOPE = 0.1
_BN_EPS = 1e-5
_LANE = 128                       # pad channel / contraction dims to this
_VMEM_LIMIT = 64 * 1024 * 1024    # safe on v5e/v6e (128 MiB) and v7x (64 MiB)


def _round_up(x, m):
    return (x + m - 1) // m * m


# ----------------------------- Pallas kernels --------------------------------

def _conv_kernel(p_ref, w_ref, f_ref):
    """One M-tile of the conv matmul (no-BN path)."""
    f_ref[...] = jnp.dot(p_ref[...], w_ref[...],
                         preferred_element_type=jnp.float32)


def _conv_stats_kernel(p_ref, w_ref, f_ref, stats_ref):
    """One M-tile of the conv matmul + per-tile partial BN statistics.

    stats block layout (8, C_pad): row 0 = sum(f), row 1 = sum(f*f), rows 2-7 = 0.
    Zero-padded M rows / channels contribute exactly 0 to both sums.
    """
    f = jnp.dot(p_ref[...], w_ref[...], preferred_element_type=jnp.float32)
    f_ref[...] = f
    c = f.shape[1]
    s = jnp.sum(f, axis=0, keepdims=True)           # (1, C_pad)
    ss = jnp.sum(f * f, axis=0, keepdims=True)      # (1, C_pad)
    row = lax.broadcasted_iota(jnp.int32, (8, c), 0)
    stats_ref[...] = jnp.where(row == 0, s, 0.0) + jnp.where(row == 1, ss, 0.0)


def _affine_lrelu_kernel(f_ref, scale_ref, shift_ref, o_ref):
    """y = leaky_relu(f * scale + shift), one lane-dense M-tile at a time."""
    y = f_ref[...] * scale_ref[...] + shift_ref[...]
    o_ref[...] = jnp.where(y >= 0, y, _NEG_SLOPE * y)


# ------------------------------- wrapper --------------------------------------

def conv_block(x, weight, gamma, beta, bias, *, stride=1, padding=None,
               use_batch_norm=True, tile_m=512):
    """Forward pass of YoloV3 ConvBlock.

    x      : (N, Cin, H, W)          float32 (NCHW)
    weight : (Cout, Cin, K, K)       float32 (OIHW)
    gamma, beta, bias : (Cout,)      float32
    returns: (N, Cout, H_out, W_out) float32 (NCHW)

    tile_m: rows per grid step.  Keep it a multiple of 128 (256 on v6e/v7x for
    full MXU columns); <=512 recommended on v7x's 64 MiB VMEM, larger on v5e/v6e.
    """
    N, Cin, H, W = x.shape
    Cout, Cin_w, K, K2 = weight.shape
    assert Cin == Cin_w and K == K2
    assert tile_m % 8 == 0
    if padding is None:
        padding = K // 2  # YOLO-style "same" padding for odd kernels

    H_out = (H + 2 * padding - K) // stride + 1
    W_out = (W + 2 * padding - K) // stride + 1
    M = N * H_out * W_out
    KKC = K * K * Cin

    # Padded sizes: lane-dense channels, MXU-aligned contraction, tile-aligned M.
    C_pad = _round_up(Cout, _LANE)
    KKC_pad = _round_up(KKC, _LANE)
    M_pad = _round_up(M, tile_m)
    grid_m = M_pad // tile_m

    # ---- glue: NCHW -> NHWC, spatial pad, im2col (in bf16) -------------------
    x_nhwc = jnp.transpose(x, (0, 2, 3, 1)).astype(jnp.bfloat16)
    x_sp = jnp.pad(x_nhwc,
                   ((0, 0), (padding, padding), (padding, padding), (0, 0)))
    cols = []
    for kh in range(K):
        for kw in range(K):
            cols.append(x_sp[:, kh:kh + stride * H_out:stride,
                             kw:kw + stride * W_out:stride, :])
    patches = jnp.concatenate(cols, axis=-1).reshape(M, KKC)      # (M, K*K*Cin)
    patches = jnp.pad(patches, ((0, M_pad - M), (0, KKC_pad - KKC)))

    # weight (Cout, Cin, KH, KW) -> (KH, KW, Cin, Cout) -> (KKC, Cout), bf16
    w_mat = jnp.transpose(weight, (2, 3, 1, 0)).reshape(KKC, Cout)
    w_mat = jnp.pad(w_mat.astype(jnp.bfloat16),
                    ((0, KKC_pad - KKC), (0, C_pad - Cout)))

    cparams = pltpu.CompilerParams(
        dimension_semantics=("parallel",),      # shards M tiles across TCs (v7x)
        vmem_limit_bytes=_VMEM_LIMIT)

    mm_in_specs = [
        pl.BlockSpec((tile_m, KKC_pad), lambda i: (i, 0)),   # patch tile
        pl.BlockSpec((KKC_pad, C_pad), lambda i: (0, 0)),    # VMEM-resident weight
    ]
    f_spec = pl.BlockSpec((tile_m, C_pad), lambda i: (i, 0))

    # ---- pass 1: tiled conv matmul (+ partial BN stats) ----------------------
    if use_batch_norm:
        f_flat, stats = pl.pallas_call(
            _conv_stats_kernel,
            out_shape=(jax.ShapeDtypeStruct((M_pad, C_pad), jnp.float32),
                       jax.ShapeDtypeStruct((grid_m * 8, C_pad), jnp.float32)),
            grid=(grid_m,),
            in_specs=mm_in_specs,
            out_specs=(f_spec, pl.BlockSpec((8, C_pad), lambda i: (i, 0))),
            compiler_params=cparams,
        )(patches, w_mat)

        # Full-batch BN statistics from per-tile partial sums (exact training-
        # mode semantics: biased variance over all N*H_out*W_out positions).
        stats = stats.reshape(grid_m, 8, C_pad)
        f_sum = jnp.sum(stats[:, 0, :], axis=0)
        f_sqsum = jnp.sum(stats[:, 1, :], axis=0)
        mean = f_sum / M                                 # padded rows add 0
        var = jnp.maximum(f_sqsum / M - mean * mean, 0.0)
        inv = lax.rsqrt(var + _BN_EPS)
        gamma_p = jnp.pad(gamma.astype(jnp.float32), (0, C_pad - Cout))
        beta_p = jnp.pad(beta.astype(jnp.float32), (0, C_pad - Cout))
        scale = gamma_p * inv
        shift = beta_p - mean * scale
    else:
        f_flat = pl.pallas_call(
            _conv_kernel,
            out_shape=jax.ShapeDtypeStruct((M_pad, C_pad), jnp.float32),
            grid=(grid_m,),
            in_specs=mm_in_specs,
            out_specs=f_spec,
            compiler_params=cparams,
        )(patches, w_mat)
        scale = jnp.ones((C_pad,), jnp.float32)
        shift = jnp.pad(bias.astype(jnp.float32), (0, C_pad - Cout))

    # ---- pass 2: affine (BN or conv-bias) + LeakyReLU, in place over f -------
    out_flat = pl.pallas_call(
        _affine_lrelu_kernel,
        out_shape=jax.ShapeDtypeStruct((M_pad, C_pad), jnp.float32),
        grid=(grid_m,),
        in_specs=[f_spec,
                  pl.BlockSpec((1, C_pad), lambda i: (0, 0)),
                  pl.BlockSpec((1, C_pad), lambda i: (0, 0))],
        out_specs=f_spec,
        input_output_aliases={0: 0},            # reuse the f buffer
        compiler_params=cparams,
    )(f_flat, scale.reshape(1, C_pad), shift.reshape(1, C_pad))

    # ---- glue: strip padding, back to NCHW ------------------------------------
    out = out_flat[:M, :Cout].reshape(N, H_out, W_out, Cout)
    return jnp.transpose(out, (0, 3, 1, 2))


# ------------------------------ reference -------------------------------------

def _reference(x, weight, gamma, beta, bias, *, use_batch_norm=True,
               eps=_BN_EPS, neg_slope=_NEG_SLOPE, padding=1):
    """Plain-JAX (f32, exact) reference of the PyTorch forward pass."""
    f = lax.conv_general_dilated(
        x, weight, window_strides=(1, 1),
        padding=[(padding, padding), (padding, padding)],
        dimension_numbers=("NCHW", "OIHW", "NCHW"))
    if use_batch_norm:
        mean = jnp.mean(f, axis=(0, 2, 3), keepdims=True)
        var = jnp.mean(jnp.square(f - mean), axis=(0, 2, 3), keepdims=True)
        f = (f - mean) / jnp.sqrt(var + eps)
        f = f * gamma.reshape(1, -1, 1, 1) + beta.reshape(1, -1, 1, 1)
    else:
        f = f + bias.reshape(1, -1, 1, 1)
    return jnp.where(f >= 0, f, neg_slope * f)


if __name__ == "__main__":
    key = jax.random.PRNGKey(0)
    k_x, k_w, k_g, k_b = jax.random.split(key, 4)

    N, Cin, H, W = 2, 4, 16, 16
    Cout, K = 8, 3

    x = jax.random.normal(k_x, (N, Cin, H, W), dtype=jnp.float32)
    weight = 0.1 * jax.random.normal(k_w, (Cout, Cin, K, K), dtype=jnp.float32)
    gamma = 1.0 + 0.1 * jax.random.normal(k_g, (Cout,), dtype=jnp.float32)
    beta = 0.1 * jax.random.normal(k_b, (Cout,), dtype=jnp.float32)
    bias = jnp.zeros((Cout,), dtype=jnp.float32)   # unused when use_batch_norm=True

    # tile_m=128 so the small test exercises a multi-tile grid (M = 512 -> 4 tiles).
    fwd = jax.jit(functools.partial(conv_block, use_batch_norm=True, tile_m=128))
    out = jax.block_until_ready(fwd(x, weight, gamma, beta, bias))

    ref = _reference(x, weight, gamma, beta, bias, use_batch_norm=True,
                     padding=K // 2)
    assert out.shape == (N, Cout, H, W), out.shape   # stride=1 "same" case only
    # bf16 matmul inputs (f32 accumulation) -> tolerance loosened vs exact f32 ref.
    assert jnp.allclose(out, ref, atol=3e-2, rtol=3e-2), \
        float(jnp.max(jnp.abs(out - ref)))

    print("KERNEL_OK")
</pallas_src>

<mosaic_0001>
module attributes {stable_mosaic.version = 11 : i64} {
  func.func @_conv_stats_kernel(%arg0: i32, %arg1: memref<128x128xbf16, #tpu.memory_space<vmem>>, %arg2: memref<128x128xbf16, #tpu.memory_space<vmem>>, %arg3: memref<128x128xf32, #tpu.memory_space<vmem>>, %arg4: memref<8x128xf32, #tpu.memory_space<vmem>>) attributes {dimension_semantics = [#tpu.dimension_semantics<parallel>], iteration_bounds = array<i64: 4>, scalar_prefetch = 0 : i64, scratch_operands = 0 : i64, tpu.core_type = #tpu.core_type<tc>, window_params = [{transform_indices = @transform_0, window_bounds = array<i64: 128, 128>}, {pipeline_mode = #tpu.pipeline_mode<synchronous>, transform_indices = @transform_1, window_bounds = array<i64: 128, 128>}, {transform_indices = @transform_2, window_bounds = array<i64: 128, 128>}, {transform_indices = @transform_3, window_bounds = array<i64: 8, 128>}]} {
    %c0 = arith.constant 0 : index
    %c0_0 = arith.constant 0 : index
    %0 = vector.load %arg1[%c0, %c0_0] : memref<128x128xbf16, #tpu.memory_space<vmem>>, vector<128x128xbf16>
    %c0_1 = arith.constant 0 : index
    %c0_2 = arith.constant 0 : index
    %1 = vector.load %arg2[%c0_1, %c0_2] : memref<128x128xbf16, #tpu.memory_space<vmem>>, vector<128x128xbf16>
    %cst = arith.constant dense<0.000000e+00> : vector<128x128xf32>
    %2 = tpu.matmul %0, %1, %cst {dimension_numbers = #tpu.dot_dimension_numbers<[1], [0], [0], [1], [0, 0, 1, 1], [], []>} : vector<128x128xbf16>, vector<128x128xbf16>, vector<128x128xf32> -> vector<128x128xf32>
    %c0_3 = arith.constant 0 : index
    %c0_4 = arith.constant 0 : index
    %3 = vector.load %arg3[%c0_3, %c0_4] : memref<128x128xf32, #tpu.memory_space<vmem>>, vector<128x128xf32>
    tpu.vector_store %arg3[%c0_3, %c0_4], %2 {strides = array<i32>} : memref<128x128xf32, #tpu.memory_space<vmem>>, vector<128x128xf32>,
    %cst_5 = arith.constant dense<0.000000e+00> : vector<128xf32>
    %4 = vector.multi_reduction <add>, %2, %cst_5 [0] : vector<128x128xf32> to vector<128xf32>
    %5 = vector.shape_cast %4 : vector<128xf32> to vector<1x128xf32>
    %6 = arith.mulf %2, %2 : vector<128x128xf32>
    %cst_6 = arith.constant dense<0.000000e+00> : vector<128xf32>
    %7 = vector.multi_reduction <add>, %6, %cst_6 [0] : vector<128x128xf32> to vector<128xf32>
    %8 = vector.shape_cast %7 : vector<128xf32> to vector<1x128xf32>
    %9 = tpu.iota {dimensions = array<i32: 0>} : vector<8x128xi32>
    %c0_i32 = arith.constant 0 : i32
    %10 = vector.broadcast %c0_i32 : i32 to vector<8x128xi32>
    %11 = arith.cmpi eq, %9, %10 : vector<8x128xi32>
    %cst_7 = arith.constant 0.000000e+00 : f32
    %12 = vector.shape_cast %5 : vector<1x128xf32> to vector<1x128xf32>
    %13 = vector.broadcast %12 : vector<1x128xf32> to vector<8x128xf32>
    %14 = vector.broadcast %cst_7 : f32 to vector<8x128xf32>
    %15 = arith.select %11, %13, %14 : vector<8x128xi1>, vector<8x128xf32>
    %c1_i32 = arith.constant 1 : i32
    %16 = vector.broadcast %c1_i32 : i32 to vector<8x128xi32>
    %17 = arith.cmpi eq, %9, %16 : vector<8x128xi32>
    %cst_8 = arith.constant 0.000000e+00 : f32
    %18 = vector.shape_cast %8 : vector<1x128xf32> to vector<1x128xf32>
    %19 = vector.broadcast %18 : vector<1x128xf32> to vector<8x128xf32>
    %20 = vector.broadcast %cst_8 : f32 to vector<8x128xf32>
    %21 = arith.select %17, %19, %20 : vector<8x128xi1>, vector<8x128xf32>
    %22 = arith.addf %15, %21 : vector<8x128xf32>
    %c0_9 = arith.constant 0 : index
    %c0_10 = arith.constant 0 : index
    %23 = vector.load %arg4[%c0_9, %c0_10] : memref<8x128xf32, #tpu.memory_space<vmem>>, vector<8x128xf32>
    tpu.vector_store %arg4[%c0_9, %c0_10], %22 {strides = array<i32>} : memref<8x128xf32, #tpu.memory_space<vmem>>, vector<8x128xf32>,
    return
  }
  func.func @transform_0(%arg0: i32) -> (i32, i32) {
    %c0_i32 = arith.constant 0 : i32
    %c0_i32_0 = arith.constant 0 : i32
    return %arg0, %c0_i32 : i32, i32
  }
  func.func @transform_1(%arg0: i32) -> (i32, i32) {
    %c0_i32 = arith.constant 0 : i32
    %c0_i32_0 = arith.constant 0 : i32
    %c0_i32_1 = arith.constant 0 : i32
    return %c0_i32, %c0_i32_0 : i32, i32
  }
  func.func @transform_2(%arg0: i32) -> (i32, i32) {
    %c0_i32 = arith.constant 0 : i32
    %c0_i32_0 = arith.constant 0 : i32
    return %arg0, %c0_i32 : i32, i32
  }
  func.func @transform_3(%arg0: i32) -> (i32, i32) {
    %c0_i32 = arith.constant 0 : i32
    %c0_i32_0 = arith.constant 0 : i32
    return %arg0, %c0_i32 : i32, i32
  }
}

module attributes {stable_mosaic.version = 11 : i64} {
  func.func @_affine_lrelu_kernel(%arg0: i32, %arg1: memref<128x128xf32, #tpu.memory_space<vmem>>, %arg2: memref<1x128xf32, #tpu.memory_space<vmem>>, %arg3: memref<1x128xf32, #tpu.memory_space<vmem>>, %arg4: memref<128x128xf32, #tpu.memory_space<vmem>>) attributes {dimension_semantics = [#tpu.dimension_semantics<parallel>], iteration_bounds = array<i64: 4>, scalar_prefetch = 0 : i64, scratch_operands = 0 : i64, tpu.core_type = #tpu.core_type<tc>, window_params = [{transform_indices = @transform_0, window_bounds = array<i64: 128, 128>}, {pipeline_mode = #tpu.pipeline_mode<synchronous>, transform_indices = @transform_1, window_bounds = array<i64: 1, 128>}, {pipeline_mode = #tpu.pipeline_mode<synchronous>, transform_indices = @transform_2, window_bounds = array<i64: 1, 128>}, {transform_indices = @transform_3, window_bounds = array<i64: 128, 128>}]} {
    %c0 = arith.constant 0 : index
    %c0_0 = arith.constant 0 : index
    %0 = vector.load %arg1[%c0, %c0_0] : memref<128x128xf32, #tpu.memory_space<vmem>>, vector<128x128xf32>
    %c0_1 = arith.constant 0 : index
    %c0_2 = arith.constant 0 : index
    %1 = vector.load %arg2[%c0_1, %c0_2] : memref<1x128xf32, #tpu.memory_space<vmem>>, vector<1x128xf32>
    %2 = vector.broadcast %1 : vector<1x128xf32> to vector<128x128xf32>
    %3 = arith.mulf %0, %2 : vector<128x128xf32>
    %c0_3 = arith.constant 0 : index
    %c0_4 = arith.constant 0 : index
    %4 = vector.load %arg3[%c0_3, %c0_4] : memref<1x128xf32, #tpu.memory_space<vmem>>, vector<1x128xf32>
    %5 = vector.broadcast %4 : vector<1x128xf32> to vector<128x128xf32>
    %6 = arith.addf %3, %5 : vector<128x128xf32>
    %cst = arith.constant 0.000000e+00 : f32
    %7 = vector.broadcast %cst : f32 to vector<128x128xf32>
    %8 = arith.cmpf oge, %6, %7 : vector<128x128xf32>
    %cst_5 = arith.constant 1.000000e-01 : f32
    %9 = vector.broadcast %cst_5 : f32 to vector<128x128xf32>
    %10 = arith.mulf %9, %6 : vector<128x128xf32>
    %11 = arith.select %8, %6, %10 : vector<128x128xi1>, vector<128x128xf32>
    %c0_6 = arith.constant 0 : index
    %c0_7 = arith.constant 0 : index
    %12 = vector.load %arg4[%c0_6, %c0_7] : memref<128x128xf32, #tpu.memory_space<vmem>>, vector<128x128xf32>
    tpu.vector_store %arg4[%c0_6, %c0_7], %11 {strides = array<i32>} : memref<128x128xf32, #tpu.memory_space<vmem>>, vector<128x128xf32>,
    return
  }
  func.func @transform_0(%arg0: i32) -> (i32, i32) {
    %c0_i32 = arith.constant 0 : i32
    %c0_i32_0 = arith.constant 0 : i32
    return %arg0, %c0_i32 : i32, i32
  }
  func.func @transform_1(%arg0: i32) -> (i32, i32) {
    %c0_i32 = arith.constant 0 : i32
    %c0_i32_0 = arith.constant 0 : i32
    %c0_i32_1 = arith.constant 0 : i32
    return %c0_i32, %c0_i32_0 : i32, i32
  }
  func.func @transform_2(%arg0: i32) -> (i32, i32) {
    %c0_i32 = arith.constant 0 : i32
    %c0_i32_0 = arith.constant 0 : i32
    %c0_i32_1 = arith.constant 0 : i32
    return %c0_i32, %c0_i32_0 : i32, i32
  }
  func.func @transform_3(%arg0: i32) -> (i32, i32) {
    %c0_i32 = arith.constant 0 : i32
    %c0_i32_0 = arith.constant 0 : i32
    return %arg0, %c0_i32 : i32, i32
  }
}

</mosaic_0001>

<llo_original>
// kernel: conv_block.3
$region0: #{conv_block.3}
  #allocation0 [shape = 'u32[]', space=smem, size = 0x4, offset = 0x4, fixed_abs, tag = 'smem constant byte address 0x4 - core index']
  #allocation1 [shape = 'u32[144,128]{1,0:T(1,128)}', space=vmem, size = 0x12000, scoped, tag = 'internal scratch']
  %s0 = inlined_call_operand.vmem [shape: f32[512,128], index: 0, kind: input, shape index: {}, may-alias: {0,3}]
  %s1 = inlined_call_operand.vmem [shape: f32[1,128], index: 1, kind: input, shape index: {}]
  %s2 = inlined_call_operand.vmem [shape: f32[1,128], index: 2, kind: input, shape index: {}]
  %s3 = inlined_call_operand.vmem [shape: f32[512,128], index: 3, kind: output, shape index: {}, may-alias: {0,3}]
  %s4 = sld [smem:[#allocation0]]
  $region45: #{conv_block.3} parent=0
    _
  %s6 = ssub.s32 1, %s4
  %s7 = scalar_select 0, %s6, %s4
  loop: start=0, step=1, limit=6
  $region2: #{conv_block.3} parent=0 // loop_pre_header
    _
  $region3: #{conv_block.3} parent=0 // loop_header
    %s9 = sphi 0, %s13
    %p10 = scmp.ge.s32.totalorder %s9, 6
    %s19 = sphi 0, %s21
    %s22 = sphi 0, %s19
    %s23 = sphi 0, %s22
    %s39 = sphi 0, %s23
    %s43 = sphi 0, %s43
    %s45 = sphi 0, %s43
    %s46 = sphi 0, %s45
    %s60 = sphi 0, %s46
    %s64 = sphi 0, %s64
    %s66 = sphi 0, %s64
    %s67 = sphi 0, %s66
    %s81 = sphi 0, %s67
    %s87 = sphi 0, %s89
    %s90 = sphi 0, %s87
    %s91 = sphi 0, %s90
    %s107 = sphi 0, %s91
  $region4: #{conv_block.3} parent=0 // loop_header_branch
    %12 = sbr.rel (%p10) target = $region8
  $region5: #{conv_block.3} parent=0 // loop_body
    %s14 = ssub.s32 %s9, 1
    %s15 = ssub.s32 %s9, 2
    %s16 = sadd.s32 %s9, 1
    %s17 = ssub.s32 %s9, %s16
    %p18 = scmp.eq.s32.totalorder %s17, 0
    %s20 = sadd.s32 %s19, 1
    %s21 = scalar_select %p18, %s19, %s20
    %p24 = pneg %p18
    %p25 = scmp.eq.s32.totalorder %s9, 3
    %p26 = por %p24, %p25
    %p27 = scmp.ne.s32.totalorder %s19, %s22
    %p28 = scmp.eq.s32.totalorder %s9, 0
    %p29 = por %p27, %p28
    %p30 = scmp.ne.s32.totalorder %s19, %s22
    %p31 = scmp.eq.s32.totalorder %s14, 3
    %p32 = por %p30, %p31
    %p33 = scmp.ne.s32.totalorder %s22, %s23
    %p34 = scmp.eq.s32.totalorder %s14, 0
    %p35 = por %p33, %p34
    %p36 = scmp.ne.s32.totalorder %s22, %s23
    %p37 = scmp.eq.s32.totalorder %s15, 3
    %p38 = por %p36, %p37
    %p40 = scmp.ne.s32.totalorder %s23, %s39
    %p41 = scmp.eq.s32.totalorder %s15, 0
    %p42 = por %p40, %p41
    %s44 = sadd.s32 %s43, 1
    %p47 = scmp.eq.s32.totalorder %s9, 3
    %p48 = scmp.ne.s32.totalorder %s43, %s45
    %p49 = scmp.eq.s32.totalorder %s9, 0
    %p50 = por %p48, %p49
    %p51 = scmp.ne.s32.totalorder %s43, %s45
    %p52 = scmp.eq.s32.totalorder %s14, 3
    %p53 = por %p51, %p52
    %p54 = scmp.ne.s32.totalorder %s45, %s46
    %p55 = scmp.eq.s32.totalorder %s14, 0
    %p56 = por %p54, %p55
    %p57 = scmp.ne.s32.totalorder %s45, %s46
    %p58 = scmp.eq.s32.totalorder %s15, 3
    %p59 = por %p57, %p58
    %p61 = scmp.ne.s32.totalorder %s46, %s60
    %p62 = scmp.eq.s32.totalorder %s15, 0
    %p63 = por %p61, %p62
    %s65 = sadd.s32 %s64, 1
    %p68 = scmp.eq.s32.totalorder %s9, 3
    %p69 = scmp.ne.s32.totalorder %s64, %s66
    %p70 = scmp.eq.s32.totalorder %s9, 0
    %p71 = por %p69, %p70
    %p72 = scmp.ne.s32.totalorder %s64, %s66
    %p73 = scmp.eq.s32.totalorder %s14, 3
    %p74 = por %p72, %p73
    %p75 = scmp.ne.s32.totalorder %s66, %s67
    %p76 = scmp.eq.s32.totalorder %s14, 0
    %p77 = por %p75, %p76
    %p78 = scmp.ne.s32.totalorder %s66, %s67
    %p79 = scmp.eq.s32.totalorder %s15, 3
    %p80 = por %p78, %p79
    %p82 = scmp.ne.s32.totalorder %s67, %s81
    %p83 = scmp.eq.s32.totalorder %s15, 0
    %p84 = por %p82, %p83
    %s85 = ssub.s32 %s9, %s16
    %p86 = scmp.eq.s32.totalorder %s85, 0
    %s88 = sadd.s32 %s87, 1
    %s89 = scalar_select %p86, %s87, %s88
    %p92 = pneg %p86
    %p93 = scmp.eq.s32.totalorder %s9, 3
    %p94 = por %p92, %p93
    %p95 = scmp.ne.s32.totalorder %s87, %s90
    %p96 = scmp.eq.s32.totalorder %s9, 0
    %p97 = por %p95, %p96
    %p98 = scmp.ne.s32.totalorder %s87, %s90
    %p99 = scmp.eq.s32.totalorder %s14, 3
    %p100 = por %p98, %p99
    %p101 = scmp.ne.s32.totalorder %s90, %s91
    %p102 = scmp.eq.s32.totalorder %s14, 0
    %p103 = por %p101, %p102
    %p104 = scmp.ne.s32.totalorder %s90, %s91
    %p105 = scmp.eq.s32.totalorder %s15, 3
    %p106 = por %p104, %p105
    %p108 = scmp.ne.s32.totalorder %s91, %s107
    %p109 = scmp.eq.s32.totalorder %s15, 0
    %p110 = por %p108, %p109
    %p111 = scmp.le.s32.totalorder 1, %s9
    %p112 = scmp.lt.s32.totalorder %s9, 5
    %p113 = pnand %p111, %p112
    %p114 = pneg %p113
    // Predicated region
    $region9: #{conv_block.3} parent=5 // pred_check
      _
    $region10: #{conv_block.3} parent=5 // pred_check_branch
      %116 = sbr.rel (%p113) target = $region12
    $region11: #{conv_block.3} parent=5 // pred_region
      %s117 = ssub.s32 %s9, 1
      // Predicated region
      $region13: #{conv_block.3} parent=11 // pred_check
        %p118 = pneg %p56
      $region14: #{conv_block.3} parent=11 // pred_check_branch
        %120 = sbr.rel (%p118) target = $region16
      $region15: #{conv_block.3} parent=11 // pred_region
        _
      $region16: #{conv_block.3} parent=11 // pred_fallthru
        _
      // Predicated region
      $region17: #{conv_block.3} parent=11 // pred_check
        %p121 = pneg %p77
      $region18: #{conv_block.3} parent=11 // pred_check_branch
        %123 = sbr.rel (%p121) target = $region20
      $region19: #{conv_block.3} parent=11 // pred_region
        _
      $region20: #{conv_block.3} parent=11 // pred_fallthru
        _
    $region12: #{conv_block.3} parent=5 // pred_fallthru
      _
    %p124 = scmp.lt.s32.totalorder %s9, 4
    // Predicated region
    $region21: #{conv_block.3} parent=5 // pred_check
      %p125 = pneg %p124
    $region22: #{conv_block.3} parent=5 // pred_check_branch
      %127 = sbr.rel (%p125) target = $region24
    $region23: #{conv_block.3} parent=5 // pred_region
      // Predicated region
      $region25: #{conv_block.3} parent=23 // pred_check
        %p128 = pneg %p29
      $region26: #{conv_block.3} parent=23 // pred_check_branch
        %130 = sbr.rel (%p128) target = $region28
      $region27: #{conv_block.3} parent=23 // pred_region
        %s131 = smul.u32 16, %s9
        %p132 = scmp.lt.s32.totalorder %s131, 63
        %s133 = scalar_select %p132, %s131, 63
        %s134 = smul.addr %s133, 8
        %s135 = scalar_lea.vmem %s0, %s134
        %s136 = smul.u32 16, %s9
      $region28: #{conv_block.3} parent=23 // pred_fallthru
        _
    $region24: #{conv_block.3} parent=5 // pred_fallthru
      _
    %p137 = scmp.le.s32.totalorder 1, %s9
    %p138 = scmp.lt.s32.totalorder %s9, 5
    %p139 = pnand %p137, %p138
    %p140 = pneg %p139
    // Predicated region
    $region29: #{conv_block.3} parent=5 // pred_check
      _
    $region30: #{conv_block.3} parent=5 // pred_check_branch
      %142 = sbr.rel (%p139) target = $region32
    $region31: #{conv_block.3} parent=5 // pred_region
      %s143 = ssub.s32 %s9, 1
      %s144 = smul.u32 16, %s14
      %p145 = scmp.lt.s32.totalorder %s144, 63
      %s146 = scalar_select %p145, %s144, 63
      %s147 = smul.addr %s146, 8
      %s148 = scalar_lea.vmem %s0, %s147
      %p149 = pneg %p35
      %p150 = pneg %p32
      %p151 = pneg %p56
      %p152 = pneg %p53
      %p153 = pneg %p77
      %p154 = pneg %p74
      %p155 = pneg %p103
      %p156 = pneg %p100
      %s157 = smul.u32 16, %s14
      %p158 = scmp.lt.s32.totalorder %s157, 63
      %s159 = scalar_select %p158, %s157, 63
      %s160 = smul.addr %s159, 8
      %s161 = scalar_lea.vmem %s3, %s160
      %s162 = smul.u32 16, %s14
      %p163 = scmp.lt.s32.totalorder %s162, 63
      %s164 = scalar_select %p163, %s162, 63
      %s165 = smul.addr %s164, 8
      %s166 = scalar_lea.vmem %s0, %s165
      %s167 = smul.u32 16, %s14
      %s168 = smul.u32 16, %s14
      %p169 = scmp.lt.s32.totalorder %s168, 63
      %s170 = scalar_select %p169, %s168, 63
      %s171 = smul.addr %s170, 8
      %s172 = scalar_lea.vmem %s3, %s171
      %s173 = smul.u32 16, %s14
      %v174 = vld [vmem:[%s166] sm:$0xff]
      %v175 = vld [vmem:[%s166 + $0x8] sm:$0xff]
      %v176 = vld [vmem:[%s166 + $0x10] sm:$0xff]
      %v177 = vld [vmem:[%s166 + $0x18] sm:$0xff]
      %v178 = vld [vmem:[%s166 + $0x20] sm:$0xff]
      %v179 = vld [vmem:[%s166 + $0x28] sm:$0xff]
      %v180 = vld [vmem:[%s166 + $0x30] sm:$0xff]
      %v181 = vld [vmem:[%s166 + $0x38] sm:$0xff]
      %v182 = vld [vmem:[%s166 + $0x40] sm:$0xff]
      %v183 = vld [vmem:[%s166 + $0x48] sm:$0xff]
      %v184 = vld [vmem:[%s166 + $0x50] sm:$0xff]
      %v185 = vld [vmem:[%s166 + $0x58] sm:$0xff]
      %v186 = vld [vmem:[%s166 + $0x60] sm:$0xff]
      %v187 = vld [vmem:[%s166 + $0x68] sm:$0xff]
      %v188 = vld [vmem:[%s166 + $0x70] sm:$0xff]
      %v189 = vld [vmem:[%s166 + $0x78] sm:$0xff]
      %v190 = vld [vmem:[%s1] sm:$0x1]
      %v192 = vlaneseq
      %v193 = vshrl.u32 %v192, 7
      %v194 = vsub.s32 0, %v193
      %v195 = vrot.slane %v190, %v194
      %v197 = vmul.f32 %v174, %v195
      %v198 = vmul.f32 %v175, %v195
      %v199 = vmul.f32 %v176, %v195
      %v200 = vmul.f32 %v177, %v195
      %v201 = vmul.f32 %v178, %v195
      %v202 = vmul.f32 %v179, %v195
      %v203 = vmul.f32 %v180, %v195
      %v204 = vmul.f32 %v181, %v195
      %v205 = vmul.f32 %v182, %v195
      %v206 = vmul.f32 %v183, %v195
      %v207 = vmul.f32 %v184, %v195
      %v208 = vmul.f32 %v185, %v195
      %v209 = vmul.f32 %v186, %v195
      %v210 = vmul.f32 %v187, %v195
      %v211 = vmul.f32 %v188, %v195
      %v212 = vmul.f32 %v189, %v195
      %v213 = vld [vmem:[%s2] sm:$0x1]
      %v215 = vlaneseq
      %v216 = vshrl.u32 %v215, 7
      %v217 = vsub.s32 0, %v216
      %v218 = vrot.slane %v213, %v217
      %v220 = vadd.f32 %v197, %v218
      %v221 = vadd.f32 %v198, %v218
      %v222 = vadd.f32 %v199, %v218
      %v223 = vadd.f32 %v200, %v218
      %v224 = vadd.f32 %v201, %v218
      %v225 = vadd.f32 %v202, %v218
      %v226 = vadd.f32 %v203, %v218
      %v227 = vadd.f32 %v204, %v218
      %v228 = vadd.f32 %v205, %v218
      %v229 = vadd.f32 %v206, %v218
      %v230 = vadd.f32 %v207, %v218
      %v231 = vadd.f32 %v208, %v218
      %v232 = vadd.f32 %v209, %v218
      %v233 = vadd.f32 %v210, %v218
      %v234 = vadd.f32 %v211, %v218
      %v235 = vadd.f32 %v212, %v218
      %vm236 = vcmp.ge.f32.partialorder %v220, 0.0
      %vm237 = vcmp.ge.f32.partialorder %v221, 0.0
      %vm238 = vcmp.ge.f32.partialorder %v222, 0.0
      %vm239 = vcmp.ge.f32.partialorder %v223, 0.0
      %vm240 = vcmp.ge.f32.partialorder %v224, 0.0
      %vm241 = vcmp.ge.f32.partialorder %v225, 0.0
      %vm242 = vcmp.ge.f32.partialorder %v226, 0.0
      %vm243 = vcmp.ge.f32.partialorder %v227, 0.0
      %vm244 = vcmp.ge.f32.partialorder %v228, 0.0
      %vm245 = vcmp.ge.f32.partialorder %v229, 0.0
      %vm246 = vcmp.ge.f32.partialorder %v230, 0.0
      %vm247 = vcmp.ge.f32.partialorder %v231, 0.0
      %vm248 = vcmp.ge.f32.partialorder %v232, 0.0
      %vm249 = vcmp.ge.f32.partialorder %v233, 0.0
      %vm250 = vcmp.ge.f32.partialorder %v234, 0.0
      %vm251 = vcmp.ge.f32.partialorder %v235, 0.0
      %v252 = vmul.f32 %v220, 0.1
      %v253 = vmul.f32 %v221, 0.1
      %v254 = vmul.f32 %v222, 0.1
      %v255 = vmul.f32 %v223, 0.1
      %v256 = vmul.f32 %v224, 0.1
      %v257 = vmul.f32 %v225, 0.1
      %v258 = vmul.f32 %v226, 0.1
      %v259 = vmul.f32 %v227, 0.1
      %v260 = vmul.f32 %v228, 0.1
      %v261 = vmul.f32 %v229, 0.1
      %v262 = vmul.f32 %v230, 0.1
      %v263 = vmul.f32 %v231, 0.1
      %v264 = vmul.f32 %v232, 0.1
      %v265 = vmul.f32 %v233, 0.1
      %v266 = vmul.f32 %v234, 0.1
      %v267 = vmul.f32 %v235, 0.1
      %v268 = vsel %vm236, %v220, %v252
      %v269 = vsel %vm237, %v221, %v253
      %v270 = vsel %vm238, %v222, %v254
      %v271 = vsel %vm239, %v223, %v255
      %v272 = vsel %vm240, %v224, %v256
      %v273 = vsel %vm241, %v225, %v257
      %v274 = vsel %vm242, %v226, %v258
      %v275 = vsel %vm243, %v227, %v259
      %v276 = vsel %vm244, %v228, %v260
      %v277 = vsel %vm245, %v229, %v261
      %v278 = vsel %vm246, %v230, %v262
      %v279 = vsel %vm247, %v231, %v263
      %v280 = vsel %vm248, %v232, %v264
      %v281 = vsel %vm249, %v233, %v265
      %v282 = vsel %vm250, %v234, %v266
      %v283 = vsel %vm251, %v235, %v267
      %284 = vst [vmem:[%s172] sm:$0xff] %v268
      %285 = vst [vmem:[%s172 + $0x8] sm:$0xff] %v269
      %286 = vst [vmem:[%s172 + $0x10] sm:$0xff] %v270
      %287 = vst [vmem:[%s172 + $0x18] sm:$0xff] %v271
      %288 = vst [vmem:[%s172 + $0x20] sm:$0xff] %v272
      %289 = vst [vmem:[%s172 + $0x28] sm:$0xff] %v273
      %290 = vst [vmem:[%s172 + $0x30] sm:$0xff] %v274
      %291 = vst [vmem:[%s172 + $0x38] sm:$0xff] %v275
      %292 = vst [vmem:[%s172 + $0x40] sm:$0xff] %v276
      %293 = vst [vmem:[%s172 + $0x48] sm:$0xff] %v277
      %294 = vst [vmem:[%s172 + $0x50] sm:$0xff] %v278
      %295 = vst [vmem:[%s172 + $0x58] sm:$0xff] %v279
      %296 = vst [vmem:[%s172 + $0x60] sm:$0xff] %v280
      %297 = vst [vmem:[%s172 + $0x68] sm:$0xff] %v281
      %298 = vst [vmem:[%s172 + $0x70] sm:$0xff] %v282
      %299 = vst [vmem:[%s172 + $0x78] sm:$0xff] %v283
      %s300 = smul.u32 16, %s14
      %p301 = scmp.lt.s32.totalorder %s300, 63
      %s302 = scalar_select %p301, %s300, 63
      %s303 = smul.addr %s302, 8
      %s304 = scalar_lea.vmem %s3, %s303
      // Predicated region
      $region33: #{conv_block.3} parent=31 // pred_check
        %p305 = pneg %p100
      $region34: #{conv_block.3} parent=31 // pred_check_branch
        %307 = sbr.rel (%p305) target = $region36
      $region35: #{conv_block.3} parent=31 // pred_region
        %s308 = smul.u32 16, %s14
      $region36: #{conv_block.3} parent=31 // pred_fallthru
        _
    $region32: #{conv_block.3} parent=5 // pred_fallthru
      _
    %p309 = scmp.le.s32.totalorder 2, %s9
    // Predicated region
    $region37: #{conv_block.3} parent=5 // pred_check
      %p310 = pneg %p309
    $region38: #{conv_block.3} parent=5 // pred_check_branch
      %312 = sbr.rel (%p310) target = $region40
    $region39: #{conv_block.3} parent=5 // pred_region
      %s313 = ssub.s32 %s9, 2
      // Predicated region
      $region41: #{conv_block.3} parent=39 // pred_check
        %p314 = pneg %p106
      $region42: #{conv_block.3} parent=39 // pred_check_branch
        %316 = sbr.rel (%p314) target = $region44
      $region43: #{conv_block.3} parent=39 // pred_region
        %s317 = smul.u32 16, %s15
        %p318 = scmp.lt.s32.totalorder %s317, 63
        %s319 = scalar_select %p318, %s317, 63
        %s320 = smul.addr %s319, 8
        %s321 = scalar_lea.vmem %s3, %s320
      $region44: #{conv_block.3} parent=39 // pred_fallthru
        _
    $region40: #{conv_block.3} parent=5 // pred_fallthru
      _
  $region6: #{conv_block.3} parent=0 // loop_footer
    %s13 = sadd.s32 1, %s9
  $region7: #{conv_block.3} parent=0 // loop_footer_branch
    %8 = sbr.rel target = $region3
  $region8: #{conv_block.3} parent=0 // loop_exit
    _

// kernel: conv_block.2
$region0: #{conv_block.2}
  #allocation0 [shape = 'u32[]', space=smem, size = 0x4, offset = 0x4, fixed_abs, tag = 'smem constant byte address 0x4 - core index']
  #allocation1 [shape = 'u32[144,128]{1,0:T(1,128)}', space=vmem, size = 0x12000, scoped, tag = 'internal scratch']
  %s0 = inlined_call_operand.vmem [shape: bf16[512,128], index: 0, kind: input, shape index: {}]
  %s1 = inlined_call_operand.vmem [shape: bf16[128,128], index: 1, kind: input, shape index: {}]
  %s2 = inlined_call_operand.vmem [shape: f32[512,128], index: 2, kind: output, shape index: {0}]
  %s3 = inlined_call_operand.vmem [shape: f32[32,128], index: 3, kind: output, shape index: {1}]
  %4 = xla_tuple %s2, %s3
  %s5 = sld [smem:[#allocation0]]
  $region49: #{conv_block.2} parent=0
    _
  %s7 = ssub.s32 1, %s5
  %s8 = scalar_select 0, %s7, %s5
  loop: start=0, step=1, limit=6
  $region2: #{conv_block.2} parent=0 // loop_pre_header
    _
  $region3: #{conv_block.2} parent=0 // loop_header
    %s10 = sphi 0, %s14
    %p11 = scmp.ge.s32.totalorder %s10, 6
    %s20 = sphi 0, %s22
    %s23 = sphi 0, %s20
    %s24 = sphi 0, %s23
    %s40 = sphi 0, %s24
    %s44 = sphi 0, %s44
    %s46 = sphi 0, %s44
    %s47 = sphi 0, %s46
    %s61 = sphi 0, %s47
    %s67 = sphi 0, %s69
    %s70 = sphi 0, %s67
    %s71 = sphi 0, %s70
    %s87 = sphi 0, %s71
    %s93 = sphi 0, %s95
    %s96 = sphi 0, %s93
    %s97 = sphi 0, %s96
    %s113 = sphi 0, %s97
  $region4: #{conv_block.2} parent=0 // loop_header_branch
    %13 = sbr.rel (%p11) target = $region8
  $region5: #{conv_block.2} parent=0 // loop_body
    %s15 = ssub.s32 %s10, 1
    %s16 = ssub.s32 %s10, 2
    %s17 = sadd.s32 %s10, 1
    %s18 = ssub.s32 %s10, %s17
    %p19 = scmp.eq.s32.totalorder %s18, 0
    %s21 = sadd.s32 %s20, 1
    %s22 = scalar_select %p19, %s20, %s21
    %p25 = pneg %p19
    %p26 = scmp.eq.s32.totalorder %s10, 3
    %p27 = por %p25, %p26
    %p28 = scmp.ne.s32.totalorder %s20, %s23
    %p29 = scmp.eq.s32.totalorder %s10, 0
    %p30 = por %p28, %p29
    %p31 = scmp.ne.s32.totalorder %s20, %s23
    %p32 = scmp.eq.s32.totalorder %s15, 3
    %p33 = por %p31, %p32
    %p34 = scmp.ne.s32.totalorder %s23, %s24
    %p35 = scmp.eq.s32.totalorder %s15, 0
    %p36 = por %p34, %p35
    %p37 = scmp.ne.s32.totalorder %s23, %s24
    %p38 = scmp.eq.s32.totalorder %s16, 3
    %p39 = por %p37, %p38
    %p41 = scmp.ne.s32.totalorder %s24, %s40
    %p42 = scmp.eq.s32.totalorder %s16, 0
    %p43 = por %p41, %p42
    %s45 = sadd.s32 %s44, 1
    %p48 = scmp.eq.s32.totalorder %s10, 3
    %p49 = scmp.ne.s32.totalorder %s44, %s46
    %p50 = scmp.eq.s32.totalorder %s10, 0
    %p51 = por %p49, %p50
    %p52 = scmp.ne.s32.totalorder %s44, %s46
    %p53 = scmp.eq.s32.totalorder %s15, 3
    %p54 = por %p52, %p53
    %p55 = scmp.ne.s32.totalorder %s46, %s47
    %p56 = scmp.eq.s32.totalorder %s15, 0
    %p57 = por %p55, %p56
    %p58 = scmp.ne.s32.totalorder %s46, %s47
    %p59 = scmp.eq.s32.totalorder %s16, 3
    %p60 = por %p58, %p59
    %p62 = scmp.ne.s32.totalorder %s47, %s61
    %p63 = scmp.eq.s32.totalorder %s16, 0
    %p64 = por %p62, %p63
    %s65 = ssub.s32 %s10, %s17
    %p66 = scmp.eq.s32.totalorder %s65, 0
    %s68 = sadd.s32 %s67, 1
    %s69 = scalar_select %p66, %s67, %s68
    %p72 = pneg %p66
    %p73 = scmp.eq.s32.totalorder %s10, 3
    %p74 = por %p72, %p73
    %p75 = scmp.ne.s32.totalorder %s67, %s70
    %p76 = scmp.eq.s32.totalorder %s10, 0
    %p77 = por %p75, %p76
    %p78 = scmp.ne.s32.totalorder %s67, %s70
    %p79 = scmp.eq.s32.totalorder %s15, 3
    %p80 = por %p78, %p79
    %p81 = scmp.ne.s32.totalorder %s70, %s71
    %p82 = scmp.eq.s32.totalorder %s15, 0
    %p83 = por %p81, %p82
    %p84 = scmp.ne.s32.totalorder %s70, %s71
    %p85 = scmp.eq.s32.totalorder %s16, 3
    %p86 = por %p84, %p85
    %p88 = scmp.ne.s32.totalorder %s71, %s87
    %p89 = scmp.eq.s32.totalorder %s16, 0
    %p90 = por %p88, %p89
    %s91 = ssub.s32 %s10, %s17
    %p92 = scmp.eq.s32.totalorder %s91, 0
    %s94 = sadd.s32 %s93, 1
    %s95 = scalar_select %p92, %s93, %s94
    %p98 = pneg %p92
    %p99 = scmp.eq.s32.totalorder %s10, 3
    %p100 = por %p98, %p99
    %p101 = scmp.ne.s32.totalorder %s93, %s96
    %p102 = scmp.eq.s32.totalorder %s10, 0
    %p103 = por %p101, %p102
    %p104 = scmp.ne.s32.totalorder %s93, %s96
    %p105 = scmp.eq.s32.totalorder %s15, 3
    %p106 = por %p104, %p105
    %p107 = scmp.ne.s32.totalorder %s96, %s97
    %p108 = scmp.eq.s32.totalorder %s15, 0
    %p109 = por %p107, %p108
    %p110 = scmp.ne.s32.totalorder %s96, %s97
    %p111 = scmp.eq.s32.totalorder %s16, 3
    %p112 = por %p110, %p111
    %p114 = scmp.ne.s32.totalorder %s97, %s113
    %p115 = scmp.eq.s32.totalorder %s16, 0
    %p116 = por %p114, %p115
    %p117 = scmp.le.s32.totalorder 1, %s10
    %p118 = scmp.lt.s32.totalorder %s10, 5
    %p119 = pnand %p117, %p118
    %p120 = pneg %p119
    // Predicated region
    $region9: #{conv_block.2} parent=5 // pred_check
      _
    $region10: #{conv_block.2} parent=5 // pred_check_branch
      %122 = sbr.rel (%p119) target = $region12
    $region11: #{conv_block.2} parent=5 // pred_region
      %s123 = ssub.s32 %s10, 1
      // Predicated region
      $region13: #{conv_block.2} parent=11 // pred_check
        %p124 = pneg %p57
      $region14: #{conv_block.2} parent=11 // pred_check_branch
        %126 = sbr.rel (%p124) target = $region16
      $region15: #{conv_block.2} parent=11 // pred_region
        _
      $region16: #{conv_block.2} parent=11 // pred_fallthru
        _
    $region12: #{conv_block.2} parent=5 // pred_fallthru
      _
    %p127 = scmp.lt.s32.totalorder %s10, 4
    // Predicated region
    $region17: #{conv_block.2} parent=5 // pred_check
      %p128 = pneg %p127
    $region18: #{conv_block.2} parent=5 // pred_check_branch
      %130 = sbr.rel (%p128) target = $region20
    $region19: #{conv_block.2} parent=5 // pred_region
      // Predicated region
      $region21: #{conv_block.2} parent=19 // pred_check
        %p131 = pneg %p30
      $region22: #{conv_block.2} parent=19 // pred_check_branch
        %133 = sbr.rel (%p131) target = $region24
      $region23: #{conv_block.2} parent=19 // pred_region
        %s134 = smul.u32 16, %s10
        %p135 = scmp.lt.s32.totalorder %s134, 63
        %s136 = scalar_select %p135, %s134, 63
        %s137 = smul.addr %s136, 4
        %s138 = scalar_lea.vmem %s0, %s137
        %s139 = smul.u32 16, %s10
      $region24: #{conv_block.2} parent=19 // pred_fallthru
        _
    $region20: #{conv_block.2} parent=5 // pred_fallthru
      _
    %p140 = scmp.le.s32.totalorder 1, %s10
    %p141 = scmp.lt.s32.totalorder %s10, 5
    %p142 = pnand %p140, %p141
    %p143 = pneg %p142
    // Predicated region
    $region25: #{conv_block.2} parent=5 // pred_check
      _
    $region26: #{conv_block.2} parent=5 // pred_check_branch
      %145 = sbr.rel (%p142) target = $region28
    $region27: #{conv_block.2} parent=5 // pred_region
      %s146 = ssub.s32 %s10, 1
      %s147 = smul.u32 16, %s15
      %p148 = scmp.lt.s32.totalorder %s147, 63
      %s149 = scalar_select %p148, %s147, 63
      %s150 = smul.addr %s149, 4
      %s151 = scalar_lea.vmem %s0, %s150
      %p152 = pneg %p36
      %p153 = pneg %p33
      %p154 = pneg %p57
      %p155 = pneg %p54
      %p156 = pneg %p83
      %p157 = pneg %p80
      %s158 = smul.u32 16, %s15
      %p159 = scmp.lt.s32.totalorder %s158, 63
      %s160 = scalar_select %p159, %s158, 63
      %s161 = smul.addr %s160, 8
      %s162 = scalar_lea.vmem %s2, %s161
      %p163 = pneg %p109
      %p164 = pneg %p106
      %p165 = scmp.lt.s32.totalorder %s15, 3
      %s166 = scalar_select %p165, %s15, 3
      %s167 = smul.addr %s166, 8
      %s168 = scalar_lea.vmem %s3, %s167
      %s169 = smul.u32 16, %s15
      %p170 = scmp.lt.s32.totalorder %s169, 63
      %s171 = scalar_select %p170, %s169, 63
      %s172 = smul.addr %s171, 4
      %s173 = scalar_lea.vmem %s0, %s172
      %s174 = smul.u32 16, %s15
      %s175 = smul.u32 16, %s15
      %p176 = scmp.lt.s32.totalorder %s175, 63
      %s177 = scalar_select %p176, %s175, 63
      %s178 = smul.addr %s177, 8
      %s179 = scalar_lea.vmem %s2, %s178
      %s180 = smul.u32 16, %s15
      %p181 = scmp.lt.s32.totalorder %s15, 3
      %s182 = scalar_select %p181, %s15, 3
      %s183 = smul.addr %s182, 8
      %s184 = scalar_lea.vmem %s3, %s183
      %v186 = vld [vmem:[%s173] sm:$0xf]
      %v187 = vld [vmem:[%s173 + $0x4] sm:$0xf]
      %v188 = vld [vmem:[%s173 + $0x8] sm:$0xf]
      %v189 = vld [vmem:[%s173 + $0xc] sm:$0xf]
      %v190 = vld [vmem:[%s173 + $0x10] sm:$0xf]
      %v191 = vld [vmem:[%s173 + $0x14] sm:$0xf]
      %v192 = vld [vmem:[%s173 + $0x18] sm:$0xf]
      %v193 = vld [vmem:[%s173 + $0x1c] sm:$0xf]
      %v194 = vld [vmem:[%s173 + $0x20] sm:$0xf]
      %v195 = vld [vmem:[%s173 + $0x24] sm:$0xf]
      %v196 = vld [vmem:[%s173 + $0x28] sm:$0xf]
      %v197 = vld [vmem:[%s173 + $0x2c] sm:$0xf]
      %v198 = vld [vmem:[%s173 + $0x30] sm:$0xf]
      %v199 = vld [vmem:[%s173 + $0x34] sm:$0xf]
      %v200 = vld [vmem:[%s173 + $0x38] sm:$0xf]
      %v201 = vld [vmem:[%s173 + $0x3c] sm:$0xf]
      %v202 = vld [vmem:[%s1] sm:$0xf]
      %v203 = vld [vmem:[%s1 + $0x4] sm:$0xf]
      %v204 = vld [vmem:[%s1 + $0x8] sm:$0xf]
      %v205 = vld [vmem:[%s1 + $0xc] sm:$0xf]
      %v206 = vld [vmem:[%s1 + $0x10] sm:$0xf]
      %v207 = vld [vmem:[%s1 + $0x14] sm:$0xf]
      %v208 = vld [vmem:[%s1 + $0x18] sm:$0xf]
      %v209 = vld [vmem:[%s1 + $0x1c] sm:$0xf]
      %v210 = vld [vmem:[%s1 + $0x20] sm:$0xf]
      %v211 = vld [vmem:[%s1 + $0x24] sm:$0xf]
      %v212 = vld [vmem:[%s1 + $0x28] sm:$0xf]
      %v213 = vld [vmem:[%s1 + $0x2c] sm:$0xf]
      %v214 = vld [vmem:[%s1 + $0x30] sm:$0xf]
      %v215 = vld [vmem:[%s1 + $0x34] sm:$0xf]
      %v216 = vld [vmem:[%s1 + $0x38] sm:$0xf]
      %v217 = vld [vmem:[%s1 + $0x3c] sm:$0xf]
      %v234 = vunpack.c.l.b16 %v186
      %v235 = vunpack.c.l.b16 %v187
      %v236 = vunpack.c.l.b16 %v188
      %v237 = vunpack.c.l.b16 %v189
      %v238 = vunpack.c.l.b16 %v190
      %v239 = vunpack.c.l.b16 %v191
      %v240 = vunpack.c.l.b16 %v192
      %v241 = vunpack.c.l.b16 %v193
      %v242 = vunpack.c.l.b16 %v194
      %v243 = vunpack.c.l.b16 %v195
      %v244 = vunpack.c.l.b16 %v196
      %v245 = vunpack.c.l.b16 %v197
      %v246 = vunpack.c.l.b16 %v198
      %v247 = vunpack.c.l.b16 %v199
      %v248 = vunpack.c.l.b16 %v200
      %v249 = vunpack.c.l.b16 %v201
      %v250 = vpack.c.b16 %v235, %v234
      %v251 = vpack.c.b16 %v237, %v236
      %v252 = vpack.c.b16 %v239, %v238
      %v253 = vpack.c.b16 %v241, %v240
      %v254 = vpack.c.b16 %v243, %v242
      %v255 = vpack.c.b16 %v245, %v244
      %v256 = vpack.c.b16 %v247, %v246
      %v257 = vpack.c.b16 %v249, %v248
      %v282 = vunpack.c.l.b16 %v202
      %v283 = vunpack.c.l.b16 %v203
      %v284 = vunpack.c.l.b16 %v204
      %v285 = vunpack.c.l.b16 %v205
      %v286 = vunpack.c.l.b16 %v206
      %v287 = vunpack.c.l.b16 %v207
      %v288 = vunpack.c.l.b16 %v208
      %v289 = vunpack.c.l.b16 %v209
      %v290 = vunpack.c.l.b16 %v210
      %v291 = vunpack.c.l.b16 %v211
      %v292 = vunpack.c.l.b16 %v212
      %v293 = vunpack.c.l.b16 %v213
      %v294 = vunpack.c.l.b16 %v214
      %v295 = vunpack.c.l.b16 %v215
      %v296 = vunpack.c.l.b16 %v216
      %v297 = vunpack.c.l.b16 %v217
      %v298 = vpack.c.b16 %v283, %v282
      %v299 = vpack.c.b16 %v285, %v284
      %v300 = vpack.c.b16 %v287, %v286
      %v301 = vpack.c.b16 %v289, %v288
      %v302 = vpack.c.b16 %v291, %v290
      %v303 = vpack.c.b16 %v293, %v292
      %v304 = vpack.c.b16 %v295, %v294
      %v305 = vpack.c.b16 %v297, %v296
      %314 = vmatprep.subr.bf16.mxu0 0
      %315 = vmatpush1.bf16.msra.mxu0 %v305
      %316 = vmatprep.subr.bf16.mxu0 0
      %317 = vmatpush1.bf16.msra.mxu0 %v304
      %318 = vmatprep.subr.bf16.mxu0 0
      %319 = vmatpush1.bf16.msra.mxu0 %v303
      %320 = vmatprep.subr.bf16.mxu0 0
      %321 = vmatpush1.bf16.msra.mxu0 %v302
      %322 = vmatprep.subr.bf16.mxu0 0
      %323 = vmatpush1.bf16.msra.mxu0 %v301
      %324 = vmatprep.subr.bf16.mxu0 0
      %325 = vmatpush1.bf16.msra.mxu0 %v300
      %326 = vmatprep.subr.bf16.mxu0 0
      %327 = vmatpush1.bf16.msra.mxu0 %v299
      %328 = vmatprep.subr.bf16.mxu0 0
      %329 = vmatpush1.bf16.msra.mxu0 %v298
      %330 = vmatprep.subr.bf16.mxu0 0
      %331 = vmatpush2.bf16.msra.mxu0 0
      %332 = vmatprep.subr.bf16.mxu0 0
      %333 = vmatpush2.bf16.msra.mxu0 0
      %334 = vmatprep.subr.bf16.mxu0 0
      %335 = vmatpush2.bf16.msra.mxu0 0
      %336 = vmatprep.subr.bf16.mxu0 0
      %337 = vmatpush2.bf16.msra.mxu0 0
      %338 = vmatprep.subr.bf16.mxu0 0
      %339 = vmatpush2.bf16.msra.mxu0 0
      %340 = vmatprep.subr.bf16.mxu0 0
      %341 = vmatpush2.bf16.msra.mxu0 0
      %342 = vmatprep.subr.bf16.mxu0 0
      %343 = vmatpush2.bf16.msra.mxu0 0
      %344 = vmatprep.subr.bf16.mxu0 0
      %345 = vmatpush2.bf16.msra.mxu0 0
      %346 = vmatprep.mubr.bf16.mxu0 0
      %347 = vmatmul.mubr.bf16.gmra.mxu0 %v250
      %v348 = vpop.f32.mrf.mxu0
      %v349 = vadd.f32 0.0, %v348
      %v350 = vpop.f32.mrf.mxu0
      %v351 = vpop.f32.mrf.mxu0
      %v352 = vadd.f32 0.0, %v351
      %v353 = vpop.f32.mrf.mxu0
      %354 = vmatprep.mubr.bf16.mxu0 0
      %355 = vmatmul.mubr.bf16.gmra.mxu0 %v251
      %v356 = vpop.f32.mrf.mxu0
      %v357 = vadd.f32 0.0, %v356
      %v358 = vpop.f32.mrf.mxu0
      %v359 = vpop.f32.mrf.mxu0
      %v360 = vadd.f32 0.0, %v359
      %v361 = vpop.f32.mrf.mxu0
      %362 = vmatprep.mubr.bf16.mxu0 0
      %363 = vmatmul.mubr.bf16.gmra.mxu0 %v252
      %v364 = vpop.f32.mrf.mxu0
      %v365 = vadd.f32 0.0, %v364
      %v366 = vpop.f32.mrf.mxu0
      %v367 = vpop.f32.mrf.mxu0
      %v368 = vadd.f32 0.0, %v367
      %v369 = vpop.f32.mrf.mxu0
      %370 = vmatprep.mubr.bf16.mxu0 0
      %371 = vmatmul.mubr.bf16.gmra.mxu0 %v253
      %v372 = vpop.f32.mrf.mxu0
      %v373 = vadd.f32 0.0, %v372
      %v374 = vpop.f32.mrf.mxu0
      %v375 = vpop.f32.mrf.mxu0
      %v376 = vadd.f32 0.0, %v375
      %v377 = vpop.f32.mrf.mxu0
      %378 = vmatprep.mubr.bf16.mxu0 0
      %379 = vmatmul.mubr.bf16.gmra.mxu0 %v254
      %v380 = vpop.f32.mrf.mxu0
      %v381 = vadd.f32 0.0, %v380
      %v382 = vpop.f32.mrf.mxu0
      %v383 = vpop.f32.mrf.mxu0
      %v384 = vadd.f32 0.0, %v383
      %v385 = vpop.f32.mrf.mxu0
      %386 = vmatprep.mubr.bf16.mxu0 0
      %387 = vmatmul.mubr.bf16.gmra.mxu0 %v255
      %v388 = vpop.f32.mrf.mxu0
      %v389 = vadd.f32 0.0, %v388
      %v390 = vpop.f32.mrf.mxu0
      %v391 = vpop.f32.mrf.mxu0
      %v392 = vadd.f32 0.0, %v391
      %v393 = vpop.f32.mrf.mxu0
      %394 = vmatprep.mubr.bf16.mxu0 0
      %395 = vmatmul.mubr.bf16.gmra.mxu0 %v256
      %v396 = vpop.f32.mrf.mxu0
      %v397 = vadd.f32 0.0, %v396
      %v398 = vpop.f32.mrf.mxu0
      %v399 = vpop.f32.mrf.mxu0
      %v400 = vadd.f32 0.0, %v399
      %v401 = vpop.f32.mrf.mxu0
      %402 = vmatprep.mubr.bf16.mxu0 0
      %403 = vmatmul.mubr.bf16.gmra.mxu0 %v257
      %v404 = vpop.f32.mrf.mxu0
      %v405 = vadd.f32 0.0, %v404
      %v406 = vpop.f32.mrf.mxu0
      %v407 = vpop.f32.mrf.mxu0
      %v408 = vadd.f32 0.0, %v407
      %v409 = vpop.f32.mrf.mxu0
      %410 = vdwg.mxu0
      %411 = vst [vmem:[%s179] sm:$0xff] %v349
      %412 = vst [vmem:[%s179 + $0x8] sm:$0xff] %v352
      %413 = vst [vmem:[%s179 + $0x10] sm:$0xff] %v357
      %414 = vst [vmem:[%s179 + $0x18] sm:$0xff] %v360
      %415 = vst [vmem:[%s179 + $0x20] sm:$0xff] %v365
      %416 = vst [vmem:[%s179 + $0x28] sm:$0xff] %v368
      %417 = vst [vmem:[%s179 + $0x30] sm:$0xff] %v373
      %418 = vst [vmem:[%s179 + $0x38] sm:$0xff] %v376
      %419 = vst [vmem:[%s179 + $0x40] sm:$0xff] %v381
      %420 = vst [vmem:[%s179 + $0x48] sm:$0xff] %v384
      %421 = vst [vmem:[%s179 + $0x50] sm:$0xff] %v389
      %422 = vst [vmem:[%s179 + $0x58] sm:$0xff] %v392
      %423 = vst [vmem:[%s179 + $0x60] sm:$0xff] %v397
      %424 = vst [vmem:[%s179 + $0x68] sm:$0xff] %v400
      %425 = vst [vmem:[%s179 + $0x70] sm:$0xff] %v405
      %426 = vst [vmem:[%s179 + $0x78] sm:$0xff] %v408
      %v427 = vadd.f32 %v349, %v352
      %v428 = vadd.f32 %v427, %v357
      %v429 = vadd.f32 %v428, %v360
      %v430 = vadd.f32 %v429, %v365
      %v431 = vadd.f32 %v430, %v368
      %v432 = vadd.f32 %v431, %v373
      %v433 = vadd.f32 %v432, %v376
      %v434 = vadd.f32 %v433, %v381
      %v435 = vadd.f32 %v434, %v384
      %v436 = vadd.f32 %v435, %v389
      %v437 = vadd.f32 %v436, %v392
      %v438 = vadd.f32 %v437, %v397
      %v439 = vadd.f32 %v438, %v400
      %v440 = vadd.f32 %v439, %v405
      %v441 = vadd.f32 %v440, %v408
      %v442 = vrot.slane %v441, 4
      %v443 = vadd.f32 %v441, %v442
      %v444 = vrot.slane %v443, 2
      %v445 = vadd.f32 %v443, %v444
      %v446 = vrot.slane %v445, 1
      %v447 = vadd.f32 %v445, %v446
      %v448 = vmul.f32 %v349, %v349
      %v449 = vmul.f32 %v352, %v352
      %v450 = vmul.f32 %v357, %v357
      %v451 = vmul.f32 %v360, %v360
      %v452 = vmul.f32 %v365, %v365
      %v453 = vmul.f32 %v368, %v368
      %v454 = vmul.f32 %v373, %v373
      %v455 = vmul.f32 %v376, %v376
      %v456 = vmul.f32 %v381, %v381
      %v457 = vmul.f32 %v384, %v384
      %v458 = vmul.f32 %v389, %v389
      %v459 = vmul.f32 %v392, %v392
      %v460 = vmul.f32 %v397, %v397
      %v461 = vmul.f32 %v400, %v400
      %v462 = vmul.f32 %v405, %v405
      %v463 = vmul.f32 %v408, %v408
      %v464 = vadd.f32 %v448, %v449
      %v465 = vadd.f32 %v464, %v450
      %v466 = vadd.f32 %v465, %v451
      %v467 = vadd.f32 %v466, %v452
      %v468 = vadd.f32 %v467, %v453
      %v469 = vadd.f32 %v468, %v454
      %v470 = vadd.f32 %v469, %v455
      %v471 = vadd.f32 %v470, %v456
      %v472 = vadd.f32 %v471, %v457
      %v473 = vadd.f32 %v472, %v458
      %v474 = vadd.f32 %v473, %v459
      %v475 = vadd.f32 %v474, %v460
      %v476 = vadd.f32 %v475, %v461
      %v477 = vadd.f32 %v476, %v462
      %v478 = vadd.f32 %v477, %v463
      %v479 = vrot.slane %v478, 4
      %v480 = vadd.f32 %v478, %v479
      %v481 = vrot.slane %v480, 2
      %v482 = vadd.f32 %v480, %v481
      %v483 = vrot.slane %v482, 1
      %v484 = vadd.f32 %v482, %v483
      %v485 = vlaneseq
      %v486 = vshrl.u32 %v485, 7
      %vm487 = vcmp.eq.s32.totalorder %v486, 0
      %v488 = vsel %vm487, %v447, 0.0
      %vm489 = vcmp.eq.s32.totalorder %v486, 1
      %v490 = vsel %vm489, %v484, 0.0
      %v491 = vadd.f32 %v488, %v490
      %492 = vst [vmem:[%s184] sm:$0xff] %v491
      %s493 = smul.u32 16, %s15
      %p494 = scmp.lt.s32.totalorder %s493, 63
      %s495 = scalar_select %p494, %s493, 63
      %s496 = smul.addr %s495, 8
      %s497 = scalar_lea.vmem %s2, %s496
      %p498 = scmp.lt.s32.totalorder %s15, 3
      %s499 = scalar_select %p498, %s15, 3
      %s500 = smul.addr %s499, 8
      %s501 = scalar_lea.vmem %s3, %s500
      // Predicated region
      $region29: #{conv_block.2} parent=27 // pred_check
        %p502 = pneg %p80
      $region30: #{conv_block.2} parent=27 // pred_check_branch
        %504 = sbr.rel (%p502) target = $region32
      $region31: #{conv_block.2} parent=27 // pred_region
        %s505 = smul.u32 16, %s15
      $region32: #{conv_block.2} parent=27 // pred_fallthru
        _
      // Predicated region
      $region33: #{conv_block.2} parent=27 // pred_check
        %p506 = pneg %p106
      $region34: #{conv_block.2} parent=27 // pred_check_branch
        %508 = sbr.rel (%p506) target = $region36
      $region35: #{conv_block.2} parent=27 // pred_region
        _
      $region36: #{conv_block.2} parent=27 // pred_fallthru
        _
    $region28: #{conv_block.2} parent=5 // pred_fallthru
      _
    %p509 = scmp.le.s32.totalorder 2, %s10
    // Predicated region
    $region37: #{conv_block.2} parent=5 // pred_check
      %p510 = pneg %p509
    $region38: #{conv_block.2} parent=5 // pred_check_branch
      %512 = sbr.rel (%p510) target = $region40
    $region39: #{conv_block.2} parent=5 // pred_region
      %s513 = ssub.s32 %s10, 2
      // Predicated region
      $region41: #{conv_block.2} parent=39 // pred_check
        %p514 = pneg %p86
      $region42: #{conv_block.2} parent=39 // pred_check_branch
        %516 = sbr.rel (%p514) target = $region44
      $region43: #{conv_block.2} parent=39 // pred_region
        %s517 = smul.u32 16, %s16
        %p518 = scmp.lt.s32.totalorder %s517, 63
        %s519 = scalar_select %p518, %s517, 63
        %s520 = smul.addr %s519, 8
        %s521 = scalar_lea.vmem %s2, %s520
      $region44: #{conv_block.2} parent=39 // pred_fallthru
        _
      // Predicated region
      $region45: #{conv_block.2} parent=39 // pred_check
        %p522 = pneg %p112
      $region46: #{conv_block.2} parent=39 // pred_check_branch
        %524 = sbr.rel (%p522) target = $region48
      $region47: #{conv_block.2} parent=39 // pred_region
        %p525 = scmp.lt.s32.totalorder %s16, 3
        %s526 = scalar_select %p525, %s16, 3
        %s527 = smul.addr %s526, 8
        %s528 = scalar_lea.vmem %s3, %s527
      $region48: #{conv_block.2} parent=39 // pred_fallthru
        _
    $region40: #{conv_block.2} parent=5 // pred_fallthru
      _
  $region6: #{conv_block.2} parent=0 // loop_footer
    %s14 = sadd.s32 1, %s10
  $region7: #{conv_block.2} parent=0 // loop_footer_branch
    %9 = sbr.rel target = $region3
  $region8: #{conv_block.2} parent=0 // loop_exit
    _

</llo_original>
